<compile_context>
chip_gen: v7x
topology: tpu7x:2x2x1
jax: 0.10.0
libtpu: 0.0.40
codegen_flags: <defaults>
</compile_context>

<pallas_src>
import functools

import jax
import jax.numpy as jnp
from jax.experimental import pallas as pl
from jax.experimental.pallas import tpu as pltpu


def _logreg_kernel(x_ref, w_ref, b_ref, o_ref):
    # x_ref: (TM, D) native dtype | w_ref: (D, C) | b_ref: (1, C) f32
    # o_ref: (TM, C) out_dtype
    x = x_ref[...].astype(jnp.bfloat16)            # in-kernel cast for the MXU
    w = w_ref[...].astype(jnp.bfloat16)            # resident tile, cheap VPU cast
    logits = jnp.dot(x, w, preferred_element_type=jnp.float32)
    logits = logits + b_ref[...]                   # (1, C) broadcast, f32
    m = jnp.max(logits, axis=1, keepdims=True)     # numerically-stable softmax
    e = jnp.exp(logits - m)
    denom = jnp.sum(e, axis=1, keepdims=True)
    o_ref[...] = (e / denom).astype(o_ref.dtype)   # exact divide (rows sum to 1)


def _round_up(v, m):
    return ((v + m - 1) // m) * m


@functools.partial(jax.jit, static_argnames=("block_rows", "out_dtype"))
def pt_logreg_forward(x, w, b, *, block_rows=512, out_dtype=jnp.float32):
    """softmax(x @ w + b, axis=1) via a row-tiled Pallas TPU kernel."""
    N, D = x.shape
    Dw, C = w.shape
    assert D == Dw
    b2 = b.reshape(1, C).astype(jnp.float32)

    SUB = 8  # sublane granularity

    # Row tile: at least 2 grid steps when possible (v7x megacore), capped by
    # block_rows and by an explicit VMEM budget.
    if N <= block_rows:
        TM = min(N, max(SUB, _round_up(pl.cdiv(N, 2), SUB)))
    else:
        TM = block_rows

    x_bytes = jnp.dtype(x.dtype).itemsize
    out_bytes = jnp.dtype(out_dtype).itemsize
    w_resident = 2 * D * C * jnp.dtype(w.dtype).itemsize   # double-buffered W
    per_row = 2 * D * x_bytes + 2 * C * out_bytes          # X + out double buffers
    vmem_budget = 40 * 1024 * 1024                          # headroom vs 48 MiB limit
    cap = max(SUB, ((vmem_budget - w_resident) // max(per_row, 1) // SUB) * SUB)
    TM = min(TM, cap)

    grid = (pl.cdiv(N, TM),)

    return pl.pallas_call(
        _logreg_kernel,
        out_shape=jax.ShapeDtypeStruct((N, C), out_dtype),
        grid=grid,
        in_specs=[
            pl.BlockSpec((TM, D), lambda i: (i, 0)),   # X: streamed, double-buffered
            pl.BlockSpec((D, C), lambda i: (0, 0)),    # W: resident in VMEM
            pl.BlockSpec((1, C), lambda i: (0, 0)),    # b: resident in VMEM
        ],
        out_specs=pl.BlockSpec((TM, C), lambda i: (i, 0)),  # unpadded output
        compiler_params=pltpu.CompilerParams(
            dimension_semantics=("parallel",),          # megacore split on v7x
            vmem_limit_bytes=48 * 1024 * 1024,          # explicit (safe on v5e-v7x)
        ),
    )(x, w, b2)


if __name__ == "__main__":
    # Deterministic inputs mirroring the module __init__ (W ~ randn(D, C),
    # b ~ randn(C)) at small shapes.
    key = jax.random.PRNGKey(0)
    kx, kw, kb = jax.random.split(key, 3)

    N, D, C = 8, 32, 16
    x = jax.random.normal(kx, (N, D), dtype=jnp.float32)
    W = jax.random.normal(kw, (D, C), dtype=jnp.float32)
    b = jax.random.normal(kb, (C,), dtype=jnp.float32)

    probs = jax.block_until_ready(pt_logreg_forward(x, W, b))

    # Reference of the PyTorch forward with the same bf16 rounding applied to
    # the matmul operands (accumulation / softmax in f32, exact matmul).
    x_r = x.astype(jnp.bfloat16).astype(jnp.float32)
    w_r = W.astype(jnp.bfloat16).astype(jnp.float32)
    logits_ref = jnp.dot(x_r, w_r, precision=jax.lax.Precision.HIGHEST) + b[None, :]
    ref = jax.nn.softmax(logits_ref, axis=1)

    assert probs.shape == (N, C)
    err = float(jnp.max(jnp.abs(probs - ref)))
    assert err < 2e-3, err
    assert bool(jnp.all(jnp.abs(jnp.sum(probs, axis=1) - 1.0) < 1e-3))

    # TODO(synk): get_loss (NLL over one-hot labels) is training-side glue,
    # not part of the forward kernel; compose it in plain JAX on `probs`.
    print("KERNEL_OK")
</pallas_src>

<mosaic_0001>
module attributes {stable_mosaic.version = 11 : i64} {
  func.func @_logreg_kernel(%arg0: i32, %arg1: memref<8x32xf32, #tpu.memory_space<vmem>>, %arg2: memref<32x16xf32, #tpu.memory_space<vmem>>, %arg3: memref<1x16xf32, #tpu.memory_space<vmem>>, %arg4: memref<8x16xf32, #tpu.memory_space<vmem>>) attributes {dimension_semantics = [#tpu.dimension_semantics<parallel>], iteration_bounds = array<i64: 1>, scalar_prefetch = 0 : i64, scratch_operands = 0 : i64, tpu.core_type = #tpu.core_type<tc>, window_params = [{transform_indices = @transform_0, window_bounds = array<i64: 8, 32>}, {pipeline_mode = #tpu.pipeline_mode<synchronous>, transform_indices = @transform_1, window_bounds = array<i64: 32, 16>}, {pipeline_mode = #tpu.pipeline_mode<synchronous>, transform_indices = @transform_2, window_bounds = array<i64: 1, 16>}, {transform_indices = @transform_3, window_bounds = array<i64: 8, 16>}]} {
    %c0 = arith.constant 0 : index
    %c0_0 = arith.constant 0 : index
    %0 = vector.load %arg1[%c0, %c0_0] : memref<8x32xf32, #tpu.memory_space<vmem>>, vector<8x32xf32>
    %1 = arith.truncf %0 : vector<8x32xf32> to vector<8x32xbf16>
    %c0_1 = arith.constant 0 : index
    %c0_2 = arith.constant 0 : index
    %2 = vector.load %arg2[%c0_1, %c0_2] : memref<32x16xf32, #tpu.memory_space<vmem>>, vector<32x16xf32>
    %3 = arith.truncf %2 : vector<32x16xf32> to vector<32x16xbf16>
    %cst = arith.constant dense<0.000000e+00> : vector<8x16xf32>
    %4 = tpu.matmul %1, %3, %cst {dimension_numbers = #tpu.dot_dimension_numbers<[1], [0], [0], [1], [0, 0, 1, 1], [], []>} : vector<8x32xbf16>, vector<32x16xbf16>, vector<8x16xf32> -> vector<8x16xf32>
    %c0_3 = arith.constant 0 : index
    %c0_4 = arith.constant 0 : index
    %5 = vector.load %arg3[%c0_3, %c0_4] : memref<1x16xf32, #tpu.memory_space<vmem>>, vector<1x16xf32>
    %6 = vector.broadcast %5 : vector<1x16xf32> to vector<8x16xf32>
    %7 = arith.addf %4, %6 : vector<8x16xf32>
    %cst_5 = arith.constant dense<0xFF800000> : vector<8xf32>
    %8 = vector.multi_reduction <maximumf>, %7, %cst_5 [1] : vector<8x16xf32> to vector<8xf32>
    %9 = vector.shape_cast %8 : vector<8xf32> to vector<8x1xf32>
    %10 = vector.broadcast %9 : vector<8x1xf32> to vector<8x16xf32>
    %11 = arith.subf %7, %10 : vector<8x16xf32>
    %12 = math.exp %11 : vector<8x16xf32>
    %cst_6 = arith.constant dense<0.000000e+00> : vector<8xf32>
    %13 = vector.multi_reduction <add>, %12, %cst_6 [1] : vector<8x16xf32> to vector<8xf32>
    %14 = vector.shape_cast %13 : vector<8xf32> to vector<8x1xf32>
    %15 = vector.broadcast %14 : vector<8x1xf32> to vector<8x16xf32>
    %16 = arith.divf %12, %15 : vector<8x16xf32>
    %c0_7 = arith.constant 0 : index
    %c0_8 = arith.constant 0 : index
    %17 = vector.load %arg4[%c0_7, %c0_8] : memref<8x16xf32, #tpu.memory_space<vmem>>, vector<8x16xf32>
    tpu.vector_store %arg4[%c0_7, %c0_8], %16 {strides = array<i32>} : memref<8x16xf32, #tpu.memory_space<vmem>>, vector<8x16xf32>,
    return
  }
  func.func @transform_0(%arg0: i32) -> (i32, i32) {
    %c0_i32 = arith.constant 0 : i32
    %c0_i32_0 = arith.constant 0 : i32
    return %arg0, %c0_i32 : i32, i32
  }
  func.func @transform_1(%arg0: i32) -> (i32, i32) {
    %c0_i32 = arith.constant 0 : i32
    %c0_i32_0 = arith.constant 0 : i32
    %c0_i32_1 = arith.constant 0 : i32
    return %c0_i32, %c0_i32_0 : i32, i32
  }
  func.func @transform_2(%arg0: i32) -> (i32, i32) {
    %c0_i32 = arith.constant 0 : i32
    %c0_i32_0 = arith.constant 0 : i32
    %c0_i32_1 = arith.constant 0 : i32
    return %c0_i32, %c0_i32_0 : i32, i32
  }
  func.func @transform_3(%arg0: i32) -> (i32, i32) {
    %c0_i32 = arith.constant 0 : i32
    %c0_i32_0 = arith.constant 0 : i32
    return %arg0, %c0_i32 : i32, i32
  }
}

</mosaic_0001>

<llo_original>
// kernel: pt_logreg_forward.1
$region0: #{pt_logreg_forward.1}
  #allocation0 [shape = 'u32[]', space=smem, size = 0x4, offset = 0x4, fixed_abs, tag = 'smem constant byte address 0x4 - core index']
  #allocation1 [shape = 'u32[144,128]{1,0:T(1,128)}', space=vmem, size = 0x12000, scoped, tag = 'internal scratch']
  %s0 = inlined_call_operand.vmem [shape: f32[8,32], index: 0, kind: input, shape index: {}]
  %s1 = inlined_call_operand.vmem [shape: f32[32,16], index: 1, kind: input, shape index: {}]
  %s2 = inlined_call_operand.vmem [shape: f32[1,16], index: 2, kind: input, shape index: {}]
  %s3 = inlined_call_operand.hbm [shape: f32[8,16], index: 3, kind: output, shape index: {}]
  %s4 = sld [smem:[#allocation0]]
  $region22: #{pt_logreg_forward.1} parent=0
    _
  %s6 = ssub.s32 1, %s4
  %s7 = scalar_select 0, %s6, %s4
  $region1: #{pt_logreg_forward.1} parent=0
    #allocation2 [shape = 'u8[4096]{0}', space=vmem, size = 0x1000, scoped, tag = 'output window, operand 0, single buffered']
    #allocation3 [shape = 's32[1]{0}', space=sflag, size = 0x4, scoped, tag = 'scoped memory for pt_logreg_forward.1']
    %8 = vsyncpa [#allocation3], 0
    // Predicated region
    $region2: #{pt_logreg_forward.1} parent=1 // pred_check
      _
    $region3: #{pt_logreg_forward.1} parent=1 // pred_check_branch
      %10 = sbr.rel (0) target = $region5
    $region4: #{pt_logreg_forward.1} parent=1 // pred_region
      _
    $region5: #{pt_logreg_forward.1} parent=1 // pred_fallthru
      _
    // Predicated region
    $region6: #{pt_logreg_forward.1} parent=1 // pred_check
      _
    $region7: #{pt_logreg_forward.1} parent=1 // pred_check_branch
      %12 = sbr.rel (0) target = $region9
    $region8: #{pt_logreg_forward.1} parent=1 // pred_region
      _
    $region9: #{pt_logreg_forward.1} parent=1 // pred_fallthru
      _
    // Predicated region
    $region10: #{pt_logreg_forward.1} parent=1 // pred_check
      _
    $region11: #{pt_logreg_forward.1} parent=1 // pred_check_branch
      %14 = sbr.rel (0) target = $region13
    $region12: #{pt_logreg_forward.1} parent=1 // pred_region
      _
    $region13: #{pt_logreg_forward.1} parent=1 // pred_fallthru
      _
    %v16 = vld [vmem:[%s0] sm:$0xff]
    %v17 = vpack.c.bf16 %v16, %v16
    %v18 = vld [vmem:[%s1] sm:$0xff]
    %v19 = vld [vmem:[%s1 + $0x8] sm:$0xff]
    %v20 = vld [vmem:[%s1 + $0x10] sm:$0xff]
    %v21 = vld [vmem:[%s1 + $0x18] sm:$0xff]
    %v22 = vpack.c.bf16 %v19, %v18
    %v23 = vpack.c.bf16 %v21, %v20
    %v24 = vld [vmem:[%s2] sm:$0x1]
    %v26 = vlaneseq
    %v27 = vshrl.u32 %v26, 7
    %v28 = vsub.s32 0, %v27
    %v29 = vrot.slane %v24, %v28
    %vm31 = vcmask 261120
    %v33 = vsel %vm31, %v17, 0
    %35 = vmatprep.subr.bf16.mxu0 0
    %36 = vmatpush1.bf16.msra.mxu0 %v22
    %37 = vmatprep.subr.bf16.mxu0 0
    %38 = vmatpush1.bf16.msra.mxu0 %v23
    %39 = vmatprep.subr.bf16.mxu0 0
    %40 = vmatpush1.bf16.msra.mxu0 0
    %41 = vmatprep.subr.bf16.mxu0 0
    %42 = vmatpush1.bf16.msra.mxu0 0
    %43 = vmatprep.subr.bf16.mxu0 0
    %44 = vmatpush1.bf16.msra.mxu0 0
    %45 = vmatprep.subr.bf16.mxu0 0
    %46 = vmatpush1.bf16.msra.mxu0 0
    %47 = vmatprep.subr.bf16.mxu0 0
    %48 = vmatpush1.bf16.msra.mxu0 0
    %49 = vmatprep.subr.bf16.mxu0 0
    %50 = vmatpush1.bf16.msra.mxu0 0
    %51 = vmatprep.subr.bf16.mxu0 0
    %52 = vmatpush1.bf16.msra.mxu0 0
    %53 = vmatprep.subr.bf16.mxu0 0
    %54 = vmatpush1.bf16.msra.mxu0 0
    %55 = vmatprep.subr.bf16.mxu0 0
    %56 = vmatpush1.bf16.msra.mxu0 0
    %57 = vmatprep.subr.bf16.mxu0 0
    %58 = vmatpush1.bf16.msra.mxu0 0
    %59 = vmatprep.subr.bf16.mxu0 0
    %60 = vmatpush1.bf16.msra.mxu0 0
    %61 = vmatprep.subr.bf16.mxu0 0
    %62 = vmatpush1.bf16.msra.mxu0 0
    %63 = vmatprep.subr.bf16.mxu0 0
    %64 = vmatpush1.bf16.msra.mxu0 0
    %65 = vmatprep.subr.bf16.mxu0 0
    %66 = vmatpush1.bf16.msra.mxu0 0
    %67 = vmatprep.mubr.bf16.mxu0 0
    %68 = vmatmul.mubr.bf16.gmra.mrb[0].mxu0 %v33
    %v69 = vpop.f32.mrb[0].mxu0
    %v70 = vadd.f32 %v29, %v69
    %v71 = vpop.f32.mrb[0].mxu0
    %v72 = vpop.f32.mrb[0].mxu0
    %v73 = vpop.f32.mrb[0].mxu0
    %74 = vdwg.mxu0
    %vm75 = vcmask 130048
    %v76 = vsel %vm75, %v70, -inf
    %77 = vmax.xlane.f32.xlu0 %v76
    %v78 = vpop.xlane.xlu0 %77
    %v79 = vsub.f32 %v70, %v78
    %v80 = vmul.f32 %v79, 1.442695
    %v81 = vpow.pop %v80
    %v82 = vsel %vm75, %v81, 0.0
    %83 = vadd.xlane.f32.xlu0 %v82
    %v84 = vpop.xlane.xlu0 %83
    %v85 = vrcp.pop %v84
    %v86 = vmul.f32 %v81, %v85
    %87 = vst.msk [vmem:[#allocation2] sm:$0xff] %vm75, %v86
    // Predicated region
    $region14: #{pt_logreg_forward.1} parent=1 // pred_check
      _
    $region15: #{pt_logreg_forward.1} parent=1 // pred_check_branch
      %89 = sbr.rel (0) target = $region17
    $region16: #{pt_logreg_forward.1} parent=1 // pred_region
      %s91 = ssub.s32 128, 128
      %92 = vsyncadd [#allocation3], %s91
      %s94 = sshll.u32 [#allocation2], 4
      %s95 = int_to_ptr.vmem [resolvable:$true] %s94
      %97 = dma.vmem_to_hbm [thread:$0]  %s95, 128, %s3, [#allocation3]
    $region17: #{pt_logreg_forward.1} parent=1 // pred_fallthru
      _
    // Predicated region
    $region18: #{pt_logreg_forward.1} parent=1 // pred_check
      _
    $region19: #{pt_logreg_forward.1} parent=1 // pred_check_branch
      %99 = sbr.rel (0) target = $region21
    $region20: #{pt_logreg_forward.1} parent=1 // pred_region
      %100 = dma.done [#allocation3], 128
    $region21: #{pt_logreg_forward.1} parent=1 // pred_fallthru
      _
    %101 = vsyncpa [#allocation3], 1

</llo_original>
